<compile_context>
chip_gen: v7x
topology: tpu7x:2x2x1
jax: 0.10.0
libtpu: 0.0.40
codegen_flags: <defaults>
</compile_context>

<pallas_src>
import math

import jax
import jax.numpy as jnp
from jax.experimental import pallas as pl
from jax.experimental.pallas import tpu as pltpu


def _round_up(x, m):
    return (x + m - 1) // m * m


def _rnn_layer_kernel(x_ref, wih_ref, whh_ref, b_ref, len_ref, o_ref,
                      h_ref, pre_ref):
    """One Elman (tanh) RNN layer. Grid axis 0 walks chunks of Tc timesteps."""
    c = pl.program_id(0)
    tc = o_ref.shape[0]

    @pl.when(c == 0)
    def _init():
        h_ref[...] = jnp.zeros_like(h_ref)          # h0 = 0

    # Hoisted input projection for the whole chunk: Tc*B rows feed the MXU.
    pre_ref[...] = jax.lax.dot_general(
        x_ref[...], wih_ref[...],
        dimension_numbers=(((2,), (0,)), ((), ())),
        preferred_element_type=jnp.float32) + b_ref[...]          # (Tc, B, H)

    lens = len_ref[...]                             # (B, 1) int32, loaded once
    whh = whh_ref[...]                              # (H, H), compute dtype
    t0 = c * tc

    def step(t, h_prev):
        # Only the recurrent matmul remains inside the serial time loop.
        pre = pre_ref[t] + jnp.dot(h_prev.astype(whh.dtype), whh,
                                   preferred_element_type=jnp.float32)
        h_new = jnp.tanh(pre)                       # f32 carry / accumulation
        keep = (t0 + t) < lens                      # (B, 1): t < length[b]
        o_ref[t] = jnp.where(keep, h_new, 0.0).astype(o_ref.dtype)
        return jnp.where(keep, h_new, h_prev)       # freeze h past the length

    h_ref[...] = jax.lax.fori_loop(0, tc, step, h_ref[...], unroll=True)


def rnn_layer(x_tbd, wih_t, whh_t, bias, lens, *, time_chunk):
    """x_tbd: (Tp, Bp, Dp) time-major, padded. Returns (Tp, Bp, Hp) float32."""
    Tp, Bp, Dp = x_tbd.shape
    Hp = whh_t.shape[0]
    assert Tp % time_chunk == 0 and Bp % 8 == 0 and Dp % 128 == 0 and Hp % 128 == 0

    itemsize = jnp.dtype(wih_t.dtype).itemsize
    # Re-derive the VMEM budget explicitly (v5e default scoped limit is 16 MiB,
    # v7x physical VMEM is 64 MiB): streamed chunks are double-buffered,
    # constant-index weights are fetched once but still allocate 2 buffers.
    est = (2 * time_chunk * Bp * (Dp * itemsize + Hp * 4)    # x / out chunks
           + 2 * (Dp + Hp) * Hp * itemsize                   # weight operands
           + (1 + time_chunk) * Bp * Hp * 4                  # h + pre scratch
           + 2 * (Hp + Bp) * 4)                              # bias + lengths
    vmem_limit = int(min(64 * 2**20, max(16 * 2**20, 2 * est)))

    return pl.pallas_call(
        _rnn_layer_kernel,
        out_shape=jax.ShapeDtypeStruct((Tp, Bp, Hp), jnp.float32),
        grid_spec=pltpu.PrefetchScalarGridSpec(
            num_scalar_prefetch=0,
            grid=(Tp // time_chunk,),
            in_specs=[
                pl.BlockSpec((time_chunk, Bp, Dp), lambda c: (c, 0, 0)),  # x chunk
                pl.BlockSpec((Dp, Hp), lambda c: (0, 0)),    # W_ih^T (fetched once)
                pl.BlockSpec((Hp, Hp), lambda c: (0, 0)),    # W_hh^T (fetched once)
                pl.BlockSpec((1, Hp), lambda c: (0, 0)),     # b_ih + b_hh
                pl.BlockSpec((Bp, 1), lambda c: (0, 0)),     # sequence lengths
            ],
            out_specs=pl.BlockSpec((time_chunk, Bp, Hp), lambda c: (c, 0, 0)),
            scratch_shapes=[
                pltpu.VMEM((Bp, Hp), jnp.float32),               # hidden-state carry
                pltpu.VMEM((time_chunk, Bp, Hp), jnp.float32),   # hoisted input proj
            ],
        ),
        compiler_params=pltpu.CompilerParams(
            dimension_semantics=("arbitrary",),      # time recurrence is serial
            vmem_limit_bytes=vmem_limit),
    )(x_tbd.astype(wih_t.dtype), wih_t, whh_t, bias, lens)


class RNNPallas:
    """Mirror of the PyTorch RNN module's forward (eval mode, bid=False)."""

    def __init__(self, d_model, hidden_size, num_layer, output_size,
                 dropout=0.1, bid=False, key=None,
                 compute_dtype=jnp.float32, time_chunk=8):
        assert not bid, "bidirectional not implemented"
        self.d_model = d_model
        self.hidden_size = hidden_size
        self.layers = num_layer
        self.compute_dtype = compute_dtype
        self.time_chunk = time_chunk
        if key is None:
            key = jax.random.PRNGKey(0)

        bound = 1.0 / math.sqrt(hidden_size)
        self.params = []                              # raw torch-layout f32 params
        for layer in range(num_layer):
            din = d_model if layer == 0 else hidden_size
            key, k1, k2, k3, k4 = jax.random.split(key, 5)
            w_ih = jax.random.uniform(k1, (hidden_size, din), jnp.float32, -bound, bound)
            w_hh = jax.random.uniform(k2, (hidden_size, hidden_size), jnp.float32, -bound, bound)
            b_ih = jax.random.uniform(k3, (hidden_size,), jnp.float32, -bound, bound)
            b_hh = jax.random.uniform(k4, (hidden_size,), jnp.float32, -bound, bound)
            self.params.append((w_ih, w_hh, b_ih, b_hh))

        # Pre-pad / transpose / cast weights once (lane/sublane aligned).
        self._hp = _round_up(hidden_size, 128)
        self._dp = _round_up(d_model, 128)
        self._padded = []
        din_p = self._dp
        for (w_ih, w_hh, b_ih, b_hh) in self.params:
            h, din = w_ih.shape
            wih_p = jnp.zeros((din_p, self._hp), compute_dtype
                              ).at[:din, :h].set(w_ih.T.astype(compute_dtype))
            whh_p = jnp.zeros((self._hp, self._hp), compute_dtype
                              ).at[:h, :h].set(w_hh.T.astype(compute_dtype))
            b_p = jnp.zeros((1, self._hp), jnp.float32).at[0, :h].set(b_ih + b_hh)
            self._padded.append((wih_p, whh_p, b_p))
            din_p = self._hp

    def __call__(self, X, l):
        """X: (B, T, d_model); l: (B,) or (B,1) true lengths."""
        l = jnp.reshape(jnp.asarray(l), (-1,)).astype(jnp.int32)
        B, T, D = X.shape
        Bp = _round_up(B, 8)
        Tp = _round_up(T, self.time_chunk)

        # Time-major, zero-padded, (8,128)-aligned input.
        x = jnp.zeros((Tp, Bp, self._dp), jnp.float32)
        x = x.at[:T, :B, :D].set(jnp.transpose(X, (1, 0, 2)).astype(jnp.float32))
        lens = jnp.zeros((Bp, 1), jnp.int32).at[:B, 0].set(l)

        h = x
        for (wih_p, whh_p, b_p) in self._padded:
            h = rnn_layer(h, wih_p, whh_p, b_p, lens, time_chunk=self.time_chunk)

        out = jnp.transpose(h, (1, 0, 2))[:B, :, :self.hidden_size]
        # pad_packed_sequence(batch_first=True) truncates to max(l); this slice
        # is the only data-dependent shape — all kernel shapes are static.
        t_out = int(jnp.max(l))
        return out[:, :t_out, :]


def _reference(X, l, params):
    """Pure-JAX reference of the packed multi-layer tanh RNN (eval mode)."""
    l = jnp.reshape(jnp.asarray(l), (-1,)).astype(jnp.int32)
    t_out = int(jnp.max(l))
    x = jnp.transpose(X[:, :t_out, :], (1, 0, 2)).astype(jnp.float32)  # (T, B, D)
    mask = (jnp.arange(t_out)[:, None] < l[None, :]).astype(jnp.float32)[:, :, None]
    for (w_ih, w_hh, b_ih, b_hh) in params:
        B = x.shape[1]
        H = w_ih.shape[0]

        def step(h, inp):
            xt, mt = inp
            h_new = jnp.tanh(xt @ w_ih.T + b_ih + h @ w_hh.T + b_hh)
            h_upd = mt * h_new + (1.0 - mt) * h
            return h_upd, mt * h_new

        _, outs = jax.lax.scan(step, jnp.zeros((B, H), jnp.float32), (x, mask))
        x = outs
    return jnp.transpose(x, (1, 0, 2))


if __name__ == "__main__":
    d_model, hidden, num_layer, output_size = 16, 32, 2, 10
    batch, max_length = 2, 8

    key = jax.random.PRNGKey(0)
    kx, kp = jax.random.split(key)
    X = jax.random.normal(kx, (batch, max_length, d_model), jnp.float32)
    lengths = jnp.array([8, 5], dtype=jnp.int32)        # true lengths, (batch,)

    model = RNNPallas(d_model, hidden, num_layer, output_size, bid=False, key=kp)
    out = jax.block_until_ready(model(X, lengths))

    ref = _reference(X, lengths, model.params)
    assert out.shape == (batch, int(jnp.max(lengths)), hidden), out.shape
    assert jnp.allclose(out, ref, rtol=1e-5, atol=1e-5), \
        float(jnp.max(jnp.abs(out - ref)))

    # bf16 weights/activations (f32 hidden carry + f32 MXU accumulation):
    # the MXU-friendly path for v6e/v7x. Loose tolerance (bf16 operands).
    model_bf16 = RNNPallas(d_model, hidden, num_layer, output_size, bid=False,
                           key=kp, compute_dtype=jnp.bfloat16)
    out_bf16 = jax.block_until_ready(model_bf16(X, lengths))
    assert out_bf16.shape == out.shape
    assert float(jnp.max(jnp.abs(out_bf16 - ref))) < 0.1

    print("KERNEL_OK")
</pallas_src>

<mosaic_0001>
module attributes {stable_mosaic.version = 11 : i64} {
  func.func @_rnn_layer_kernel(%arg0: i32, %arg1: memref<8x8x128xf32, #tpu.memory_space<vmem>>, %arg2: memref<128x128xf32, #tpu.memory_space<vmem>>, %arg3: memref<128x128xf32, #tpu.memory_space<vmem>>, %arg4: memref<1x128xf32, #tpu.memory_space<vmem>>, %arg5: memref<8x1xi32, #tpu.memory_space<vmem>>, %arg6: memref<8x8x128xf32, #tpu.memory_space<vmem>>, %arg7: memref<8x128xf32, #tpu.memory_space<vmem>>, %arg8: memref<8x8x128xf32, #tpu.memory_space<vmem>>) attributes {dimension_semantics = [#tpu.dimension_semantics<arbitrary>], iteration_bounds = array<i64: 1>, scalar_prefetch = 0 : i64, scratch_operands = 2 : i64, tpu.core_type = #tpu.core_type<tc>, window_params = [{transform_indices = @transform_0, window_bounds = array<i64: 8, 8, 128>}, {pipeline_mode = #tpu.pipeline_mode<synchronous>, transform_indices = @transform_1, window_bounds = array<i64: 128, 128>}, {pipeline_mode = #tpu.pipeline_mode<synchronous>, transform_indices = @transform_2, window_bounds = array<i64: 128, 128>}, {pipeline_mode = #tpu.pipeline_mode<synchronous>, transform_indices = @transform_3, window_bounds = array<i64: 1, 128>}, {pipeline_mode = #tpu.pipeline_mode<synchronous>, transform_indices = @transform_4, window_bounds = array<i64: 8, 1>}, {transform_indices = @transform_5, window_bounds = array<i64: 8, 8, 128>}]} {
    %c0_i32 = arith.constant 0 : i32
    %0 = arith.cmpi eq, %arg0, %c0_i32 : i32
    %1 = arith.extui %0 : i1 to i32
    %c0_i32_0 = arith.constant 0 : i32
    %2 = arith.cmpi ne, %1, %c0_i32_0 : i32
    scf.if %2 {
      %cst_68 = arith.constant 0.000000e+00 : f32
      %176 = vector.broadcast %cst_68 : f32 to vector<8x128xf32>
      %c0_69 = arith.constant 0 : index
      %c0_70 = arith.constant 0 : index
      %177 = vector.load %arg7[%c0_69, %c0_70] : memref<8x128xf32, #tpu.memory_space<vmem>>, vector<8x128xf32>
      tpu.vector_store %arg7[%c0_69, %c0_70], %176 {strides = array<i32>} : memref<8x128xf32, #tpu.memory_space<vmem>>, vector<8x128xf32>,
    } else {
    }
    %c0 = arith.constant 0 : index
    %c0_1 = arith.constant 0 : index
    %c0_2 = arith.constant 0 : index
    %3 = vector.load %arg1[%c0, %c0_1, %c0_2] : memref<8x8x128xf32, #tpu.memory_space<vmem>>, vector<8x8x128xf32>
    %c0_3 = arith.constant 0 : index
    %c0_4 = arith.constant 0 : index
    %4 = vector.load %arg2[%c0_3, %c0_4] : memref<128x128xf32, #tpu.memory_space<vmem>>, vector<128x128xf32>
    %cst = arith.constant dense<0.000000e+00> : vector<8x8x128xf32>
    %5 = tpu.matmul %3, %4, %cst {dimension_numbers = #tpu.dot_dimension_numbers<[2], [0], [0, 1], [1], [0, 0, 0, 1, 1, 1], [], []>} : vector<8x8x128xf32>, vector<128x128xf32>, vector<8x8x128xf32> -> vector<8x8x128xf32>
    %c0_5 = arith.constant 0 : index
    %c0_6 = arith.constant 0 : index
    %6 = vector.load %arg4[%c0_5, %c0_6] : memref<1x128xf32, #tpu.memory_space<vmem>>, vector<1x128xf32>
    %7 = vector.shape_cast %6 : vector<1x128xf32> to vector<1x1x128xf32>
    %8 = vector.broadcast %7 : vector<1x1x128xf32> to vector<8x8x128xf32>
    %9 = arith.addf %5, %8 : vector<8x8x128xf32>
    %c0_7 = arith.constant 0 : index
    %c0_8 = arith.constant 0 : index
    %c0_9 = arith.constant 0 : index
    %10 = vector.load %arg8[%c0_7, %c0_8, %c0_9] : memref<8x8x128xf32, #tpu.memory_space<vmem>>, vector<8x8x128xf32>
    tpu.vector_store %arg8[%c0_7, %c0_8, %c0_9], %9 {strides = array<i32>} : memref<8x8x128xf32, #tpu.memory_space<vmem>>, vector<8x8x128xf32>,
    %c0_10 = arith.constant 0 : index
    %c0_11 = arith.constant 0 : index
    %11 = vector.load %arg5[%c0_10, %c0_11] : memref<8x1xi32, #tpu.memory_space<vmem>>, vector<8x1xi32>
    %c0_12 = arith.constant 0 : index
    %c0_13 = arith.constant 0 : index
    %12 = vector.load %arg3[%c0_12, %c0_13] : memref<128x128xf32, #tpu.memory_space<vmem>>, vector<128x128xf32>
    %c8_i32 = arith.constant 8 : i32
    %13 = arith.muli %arg0, %c8_i32 : i32
    %c0_14 = arith.constant 0 : index
    %c0_15 = arith.constant 0 : index
    %14 = vector.load %arg7[%c0_14, %c0_15] : memref<8x128xf32, #tpu.memory_space<vmem>>, vector<8x128xf32>
    %c0_i32_16 = arith.constant 0 : i32
    %15 = arith.index_cast %c0_i32_16 : i32 to index
    %c0_17 = arith.constant 0 : index
    %c0_18 = arith.constant 0 : index
    %16 = vector.load %arg8[%15, %c0_17, %c0_18] : memref<8x8x128xf32, #tpu.memory_space<vmem>>, vector<1x8x128xf32>
    %17 = vector.shape_cast %16 : vector<1x8x128xf32> to vector<8x128xf32>
    %cst_19 = arith.constant dense<0.000000e+00> : vector<8x128xf32>
    %18 = tpu.matmul %14, %12, %cst_19 {dimension_numbers = #tpu.dot_dimension_numbers<[1], [0], [0], [1], [0, 0, 1, 1], [], []>} : vector<8x128xf32>, vector<128x128xf32>, vector<8x128xf32> -> vector<8x128xf32>
    %19 = arith.addf %17, %18 : vector<8x128xf32>
    %20 = math.tanh %19 : vector<8x128xf32>
    %21 = arith.addi %13, %c0_i32_16 : i32
    %22 = vector.broadcast %21 : i32 to vector<8x1xi32>
    %23 = arith.cmpi slt, %22, %11 : vector<8x1xi32>
    %cst_20 = arith.constant 0.000000e+00 : f32
    %24 = vector.shape_cast %23 : vector<8x1xi1> to vector<8x1xi1>
    %25 = vector.broadcast %24 : vector<8x1xi1> to vector<8x128xi1>
    %26 = vector.broadcast %cst_20 : f32 to vector<8x128xf32>
    %27 = arith.select %25, %20, %26 : vector<8x128xi1>, vector<8x128xf32>
    %28 = arith.index_cast %c0_i32_16 : i32 to index
    %c0_21 = arith.constant 0 : index
    %c0_22 = arith.constant 0 : index
    %29 = vector.load %arg6[%28, %c0_21, %c0_22] : memref<8x8x128xf32, #tpu.memory_space<vmem>>, vector<1x8x128xf32>
    %30 = vector.shape_cast %29 : vector<1x8x128xf32> to vector<8x128xf32>
    %31 = vector.shape_cast %27 : vector<8x128xf32> to vector<1x8x128xf32>
    tpu.vector_store %arg6[%28, %c0_21, %c0_22], %31 {strides = array<i32>} : memref<8x8x128xf32, #tpu.memory_space<vmem>>, vector<1x8x128xf32>,
    %32 = vector.shape_cast %23 : vector<8x1xi1> to vector<8x1xi1>
    %33 = vector.broadcast %32 : vector<8x1xi1> to vector<8x128xi1>
    %34 = arith.select %33, %20, %14 : vector<8x128xi1>, vector<8x128xf32>
    %c1_i32 = arith.constant 1 : i32
    %35 = arith.index_cast %c1_i32 : i32 to index
    %c0_23 = arith.constant 0 : index
    %c0_24 = arith.constant 0 : index
    %36 = vector.load %arg8[%35, %c0_23, %c0_24] : memref<8x8x128xf32, #tpu.memory_space<vmem>>, vector<1x8x128xf32>
    %37 = vector.shape_cast %36 : vector<1x8x128xf32> to vector<8x128xf32>
    %cst_25 = arith.constant dense<0.000000e+00> : vector<8x128xf32>
    %38 = tpu.matmul %34, %12, %cst_25 {dimension_numbers = #tpu.dot_dimension_numbers<[1], [0], [0], [1], [0, 0, 1, 1], [], []>} : vector<8x128xf32>, vector<128x128xf32>, vector<8x128xf32> -> vector<8x128xf32>
    %39 = arith.addf %37, %38 : vector<8x128xf32>
    %40 = math.tanh %39 : vector<8x128xf32>
    %41 = arith.addi %13, %c1_i32 : i32
    %42 = vector.broadcast %41 : i32 to vector<8x1xi32>
    %43 = arith.cmpi slt, %42, %11 : vector<8x1xi32>
    %cst_26 = arith.constant 0.000000e+00 : f32
    %44 = vector.shape_cast %43 : vector<8x1xi1> to vector<8x1xi1>
    %45 = vector.broadcast %44 : vector<8x1xi1> to vector<8x128xi1>
    %46 = vector.broadcast %cst_26 : f32 to vector<8x128xf32>
    %47 = arith.select %45, %40, %46 : vector<8x128xi1>, vector<8x128xf32>
    %48 = arith.index_cast %c1_i32 : i32 to index
    %c0_27 = arith.constant 0 : index
    %c0_28 = arith.constant 0 : index
    %49 = vector.load %arg6[%48, %c0_27, %c0_28] : memref<8x8x128xf32, #tpu.memory_space<vmem>>, vector<1x8x128xf32>
    %50 = vector.shape_cast %49 : vector<1x8x128xf32> to vector<8x128xf32>
    %51 = vector.shape_cast %47 : vector<8x128xf32> to vector<1x8x128xf32>
    tpu.vector_store %arg6[%48, %c0_27, %c0_28], %51 {strides = array<i32>} : memref<8x8x128xf32, #tpu.memory_space<vmem>>, vector<1x8x128xf32>,
    %52 = vector.shape_cast %43 : vector<8x1xi1> to vector<8x1xi1>
    %53 = vector.broadcast %52 : vector<8x1xi1> to vector<8x128xi1>
    %54 = arith.select %53, %40, %34 : vector<8x128xi1>, vector<8x128xf32>
    %c2_i32 = arith.constant 2 : i32
    %55 = arith.index_cast %c2_i32 : i32 to index
    %c0_29 = arith.constant 0 : index
    %c0_30 = arith.constant 0 : index
    %56 = vector.load %arg8[%55, %c0_29, %c0_30] : memref<8x8x128xf32, #tpu.memory_space<vmem>>, vector<1x8x128xf32>
    %57 = vector.shape_cast %56 : vector<1x8x128xf32> to vector<8x128xf32>
    %cst_31 = arith.constant dense<0.000000e+00> : vector<8x128xf32>
    %58 = tpu.matmul %54, %12, %cst_31 {dimension_numbers = #tpu.dot_dimension_numbers<[1], [0], [0], [1], [0, 0, 1, 1], [], []>} : vector<8x128xf32>, vector<128x128xf32>, vector<8x128xf32> -> vector<8x128xf32>
    %59 = arith.addf %57, %58 : vector<8x128xf32>
    %60 = math.tanh %59 : vector<8x128xf32>
    %61 = arith.addi %13, %c2_i32 : i32
    %62 = vector.broadcast %61 : i32 to vector<8x1xi32>
    %63 = arith.cmpi slt, %62, %11 : vector<8x1xi32>
    %cst_32 = arith.constant 0.000000e+00 : f32
    %64 = vector.shape_cast %63 : vector<8x1xi1> to vector<8x1xi1>
    %65 = vector.broadcast %64 : vector<8x1xi1> to vector<8x128xi1>
    %66 = vector.broadcast %cst_32 : f32 to vector<8x128xf32>
    %67 = arith.select %65, %60, %66 : vector<8x128xi1>, vector<8x128xf32>
    %68 = arith.index_cast %c2_i32 : i32 to index
    %c0_33 = arith.constant 0 : index
    %c0_34 = arith.constant 0 : index
    %69 = vector.load %arg6[%68, %c0_33, %c0_34] : memref<8x8x128xf32, #tpu.memory_space<vmem>>, vector<1x8x128xf32>
    %70 = vector.shape_cast %69 : vector<1x8x128xf32> to vector<8x128xf32>
    %71 = vector.shape_cast %67 : vector<8x128xf32> to vector<1x8x128xf32>
    tpu.vector_store %arg6[%68, %c0_33, %c0_34], %71 {strides = array<i32>} : memref<8x8x128xf32, #tpu.memory_space<vmem>>, vector<1x8x128xf32>,
    %72 = vector.shape_cast %63 : vector<8x1xi1> to vector<8x1xi1>
    %73 = vector.broadcast %72 : vector<8x1xi1> to vector<8x128xi1>
    %74 = arith.select %73, %60, %54 : vector<8x128xi1>, vector<8x128xf32>
    %c3_i32 = arith.constant 3 : i32
    %75 = arith.index_cast %c3_i32 : i32 to index
    %c0_35 = arith.constant 0 : index
    %c0_36 = arith.constant 0 : index
    %76 = vector.load %arg8[%75, %c0_35, %c0_36] : memref<8x8x128xf32, #tpu.memory_space<vmem>>, vector<1x8x128xf32>
    %77 = vector.shape_cast %76 : vector<1x8x128xf32> to vector<8x128xf32>
    %cst_37 = arith.constant dense<0.000000e+00> : vector<8x128xf32>
    %78 = tpu.matmul %74, %12, %cst_37 {dimension_numbers = #tpu.dot_dimension_numbers<[1], [0], [0], [1], [0, 0, 1, 1], [], []>} : vector<8x128xf32>, vector<128x128xf32>, vector<8x128xf32> -> vector<8x128xf32>
    %79 = arith.addf %77, %78 : vector<8x128xf32>
    %80 = math.tanh %79 : vector<8x128xf32>
    %81 = arith.addi %13, %c3_i32 : i32
    %82 = vector.broadcast %81 : i32 to vector<8x1xi32>
    %83 = arith.cmpi slt, %82, %11 : vector<8x1xi32>
    %cst_38 = arith.constant 0.000000e+00 : f32
    %84 = vector.shape_cast %83 : vector<8x1xi1> to vector<8x1xi1>
    %85 = vector.broadcast %84 : vector<8x1xi1> to vector<8x128xi1>
    %86 = vector.broadcast %cst_38 : f32 to vector<8x128xf32>
    %87 = arith.select %85, %80, %86 : vector<8x128xi1>, vector<8x128xf32>
    %88 = arith.index_cast %c3_i32 : i32 to index
    %c0_39 = arith.constant 0 : index
    %c0_40 = arith.constant 0 : index
    %89 = vector.load %arg6[%88, %c0_39, %c0_40] : memref<8x8x128xf32, #tpu.memory_space<vmem>>, vector<1x8x128xf32>
    %90 = vector.shape_cast %89 : vector<1x8x128xf32> to vector<8x128xf32>
    %91 = vector.shape_cast %87 : vector<8x128xf32> to vector<1x8x128xf32>
    tpu.vector_store %arg6[%88, %c0_39, %c0_40], %91 {strides = array<i32>} : memref<8x8x128xf32, #tpu.memory_space<vmem>>, vector<1x8x128xf32>,
    %92 = vector.shape_cast %83 : vector<8x1xi1> to vector<8x1xi1>
    %93 = vector.broadcast %92 : vector<8x1xi1> to vector<8x128xi1>
    %94 = arith.select %93, %80, %74 : vector<8x128xi1>, vector<8x128xf32>
    %c4_i32 = arith.constant 4 : i32
    %95 = arith.index_cast %c4_i32 : i32 to index
    %c0_41 = arith.constant 0 : index
    %c0_42 = arith.constant 0 : index
    %96 = vector.load %arg8[%95, %c0_41, %c0_42] : memref<8x8x128xf32, #tpu.memory_space<vmem>>, vector<1x8x128xf32>
    %97 = vector.shape_cast %96 : vector<1x8x128xf32> to vector<8x128xf32>
    %cst_43 = arith.constant dense<0.000000e+00> : vector<8x128xf32>
    %98 = tpu.matmul %94, %12, %cst_43 {dimension_numbers = #tpu.dot_dimension_numbers<[1], [0], [0], [1], [0, 0, 1, 1], [], []>} : vector<8x128xf32>, vector<128x128xf32>, vector<8x128xf32> -> vector<8x128xf32>
    %99 = arith.addf %97, %98 : vector<8x128xf32>
    %100 = math.tanh %99 : vector<8x128xf32>
    %101 = arith.addi %13, %c4_i32 : i32
    %102 = vector.broadcast %101 : i32 to vector<8x1xi32>
    %103 = arith.cmpi slt, %102, %11 : vector<8x1xi32>
    %cst_44 = arith.constant 0.000000e+00 : f32
    %104 = vector.shape_cast %103 : vector<8x1xi1> to vector<8x1xi1>
    %105 = vector.broadcast %104 : vector<8x1xi1> to vector<8x128xi1>
    %106 = vector.broadcast %cst_44 : f32 to vector<8x128xf32>
    %107 = arith.select %105, %100, %106 : vector<8x128xi1>, vector<8x128xf32>
    %108 = arith.index_cast %c4_i32 : i32 to index
    %c0_45 = arith.constant 0 : index
    %c0_46 = arith.constant 0 : index
    %109 = vector.load %arg6[%108, %c0_45, %c0_46] : memref<8x8x128xf32, #tpu.memory_space<vmem>>, vector<1x8x128xf32>
    %110 = vector.shape_cast %109 : vector<1x8x128xf32> to vector<8x128xf32>
    %111 = vector.shape_cast %107 : vector<8x128xf32> to vector<1x8x128xf32>
    tpu.vector_store %arg6[%108, %c0_45, %c0_46], %111 {strides = array<i32>} : memref<8x8x128xf32, #tpu.memory_space<vmem>>, vector<1x8x128xf32>,
    %112 = vector.shape_cast %103 : vector<8x1xi1> to vector<8x1xi1>
    %113 = vector.broadcast %112 : vector<8x1xi1> to vector<8x128xi1>
    %114 = arith.select %113, %100, %94 : vector<8x128xi1>, vector<8x128xf32>
    %c5_i32 = arith.constant 5 : i32
    %115 = arith.index_cast %c5_i32 : i32 to index
    %c0_47 = arith.constant 0 : index
    %c0_48 = arith.constant 0 : index
    %116 = vector.load %arg8[%115, %c0_47, %c0_48] : memref<8x8x128xf32, #tpu.memory_space<vmem>>, vector<1x8x128xf32>
    %117 = vector.shape_cast %116 : vector<1x8x128xf32> to vector<8x128xf32>
    %cst_49 = arith.constant dense<0.000000e+00> : vector<8x128xf32>
    %118 = tpu.matmul %114, %12, %cst_49 {dimension_numbers = #tpu.dot_dimension_numbers<[1], [0], [0], [1], [0, 0, 1, 1], [], []>} : vector<8x128xf32>, vector<128x128xf32>, vector<8x128xf32> -> vector<8x128xf32>
    %119 = arith.addf %117, %118 : vector<8x128xf32>
    %120 = math.tanh %119 : vector<8x128xf32>
    %121 = arith.addi %13, %c5_i32 : i32
    %122 = vector.broadcast %121 : i32 to vector<8x1xi32>
    %123 = arith.cmpi slt, %122, %11 : vector<8x1xi32>
    %cst_50 = arith.constant 0.000000e+00 : f32
    %124 = vector.shape_cast %123 : vector<8x1xi1> to vector<8x1xi1>
    %125 = vector.broadcast %124 : vector<8x1xi1> to vector<8x128xi1>
    %126 = vector.broadcast %cst_50 : f32 to vector<8x128xf32>
    %127 = arith.select %125, %120, %126 : vector<8x128xi1>, vector<8x128xf32>
    %128 = arith.index_cast %c5_i32 : i32 to index
    %c0_51 = arith.constant 0 : index
    %c0_52 = arith.constant 0 : index
    %129 = vector.load %arg6[%128, %c0_51, %c0_52] : memref<8x8x128xf32, #tpu.memory_space<vmem>>, vector<1x8x128xf32>
    %130 = vector.shape_cast %129 : vector<1x8x128xf32> to vector<8x128xf32>
    %131 = vector.shape_cast %127 : vector<8x128xf32> to vector<1x8x128xf32>
    tpu.vector_store %arg6[%128, %c0_51, %c0_52], %131 {strides = array<i32>} : memref<8x8x128xf32, #tpu.memory_space<vmem>>, vector<1x8x128xf32>,
    %132 = vector.shape_cast %123 : vector<8x1xi1> to vector<8x1xi1>
    %133 = vector.broadcast %132 : vector<8x1xi1> to vector<8x128xi1>
    %134 = arith.select %133, %120, %114 : vector<8x128xi1>, vector<8x128xf32>
    %c6_i32 = arith.constant 6 : i32
    %135 = arith.index_cast %c6_i32 : i32 to index
    %c0_53 = arith.constant 0 : index
    %c0_54 = arith.constant 0 : index
    %136 = vector.load %arg8[%135, %c0_53, %c0_54] : memref<8x8x128xf32, #tpu.memory_space<vmem>>, vector<1x8x128xf32>
    %137 = vector.shape_cast %136 : vector<1x8x128xf32> to vector<8x128xf32>
    %cst_55 = arith.constant dense<0.000000e+00> : vector<8x128xf32>
    %138 = tpu.matmul %134, %12, %cst_55 {dimension_numbers = #tpu.dot_dimension_numbers<[1], [0], [0], [1], [0, 0, 1, 1], [], []>} : vector<8x128xf32>, vector<128x128xf32>, vector<8x128xf32> -> vector<8x128xf32>
    %139 = arith.addf %137, %138 : vector<8x128xf32>
    %140 = math.tanh %139 : vector<8x128xf32>
    %141 = arith.addi %13, %c6_i32 : i32
    %142 = vector.broadcast %141 : i32 to vector<8x1xi32>
    %143 = arith.cmpi slt, %142, %11 : vector<8x1xi32>
    %cst_56 = arith.constant 0.000000e+00 : f32
    %144 = vector.shape_cast %143 : vector<8x1xi1> to vector<8x1xi1>
    %145 = vector.broadcast %144 : vector<8x1xi1> to vector<8x128xi1>
    %146 = vector.broadcast %cst_56 : f32 to vector<8x128xf32>
    %147 = arith.select %145, %140, %146 : vector<8x128xi1>, vector<8x128xf32>
    %148 = arith.index_cast %c6_i32 : i32 to index
    %c0_57 = arith.constant 0 : index
    %c0_58 = arith.constant 0 : index
    %149 = vector.load %arg6[%148, %c0_57, %c0_58] : memref<8x8x128xf32, #tpu.memory_space<vmem>>, vector<1x8x128xf32>
    %150 = vector.shape_cast %149 : vector<1x8x128xf32> to vector<8x128xf32>
    %151 = vector.shape_cast %147 : vector<8x128xf32> to vector<1x8x128xf32>
    tpu.vector_store %arg6[%148, %c0_57, %c0_58], %151 {strides = array<i32>} : memref<8x8x128xf32, #tpu.memory_space<vmem>>, vector<1x8x128xf32>,
    %152 = vector.shape_cast %143 : vector<8x1xi1> to vector<8x1xi1>
    %153 = vector.broadcast %152 : vector<8x1xi1> to vector<8x128xi1>
    %154 = arith.select %153, %140, %134 : vector<8x128xi1>, vector<8x128xf32>
    %c7_i32 = arith.constant 7 : i32
    %155 = arith.index_cast %c7_i32 : i32 to index
    %c0_59 = arith.constant 0 : index
    %c0_60 = arith.constant 0 : index
    %156 = vector.load %arg8[%155, %c0_59, %c0_60] : memref<8x8x128xf32, #tpu.memory_space<vmem>>, vector<1x8x128xf32>
    %157 = vector.shape_cast %156 : vector<1x8x128xf32> to vector<8x128xf32>
    %cst_61 = arith.constant dense<0.000000e+00> : vector<8x128xf32>
    %158 = tpu.matmul %154, %12, %cst_61 {dimension_numbers = #tpu.dot_dimension_numbers<[1], [0], [0], [1], [0, 0, 1, 1], [], []>} : vector<8x128xf32>, vector<128x128xf32>, vector<8x128xf32> -> vector<8x128xf32>
    %159 = arith.addf %157, %158 : vector<8x128xf32>
    %160 = math.tanh %159 : vector<8x128xf32>
    %161 = arith.addi %13, %c7_i32 : i32
    %162 = vector.broadcast %161 : i32 to vector<8x1xi32>
    %163 = arith.cmpi slt, %162, %11 : vector<8x1xi32>
    %cst_62 = arith.constant 0.000000e+00 : f32
    %164 = vector.shape_cast %163 : vector<8x1xi1> to vector<8x1xi1>
    %165 = vector.broadcast %164 : vector<8x1xi1> to vector<8x128xi1>
    %166 = vector.broadcast %cst_62 : f32 to vector<8x128xf32>
    %167 = arith.select %165, %160, %166 : vector<8x128xi1>, vector<8x128xf32>
    %168 = arith.index_cast %c7_i32 : i32 to index
    %c0_63 = arith.constant 0 : index
    %c0_64 = arith.constant 0 : index
    %169 = vector.load %arg6[%168, %c0_63, %c0_64] : memref<8x8x128xf32, #tpu.memory_space<vmem>>, vector<1x8x128xf32>
    %170 = vector.shape_cast %169 : vector<1x8x128xf32> to vector<8x128xf32>
    %171 = vector.shape_cast %167 : vector<8x128xf32> to vector<1x8x128xf32>
    tpu.vector_store %arg6[%168, %c0_63, %c0_64], %171 {strides = array<i32>} : memref<8x8x128xf32, #tpu.memory_space<vmem>>, vector<1x8x128xf32>,
    %172 = vector.shape_cast %163 : vector<8x1xi1> to vector<8x1xi1>
    %173 = vector.broadcast %172 : vector<8x1xi1> to vector<8x128xi1>
    %174 = arith.select %173, %160, %154 : vector<8x128xi1>, vector<8x128xf32>
    %c8_i32_65 = arith.constant 8 : i32
    %c0_66 = arith.constant 0 : index
    %c0_67 = arith.constant 0 : index
    %175 = vector.load %arg7[%c0_66, %c0_67] : memref<8x128xf32, #tpu.memory_space<vmem>>, vector<8x128xf32>
    tpu.vector_store %arg7[%c0_66, %c0_67], %174 {strides = array<i32>} : memref<8x128xf32, #tpu.memory_space<vmem>>, vector<8x128xf32>,
    return
  }
  func.func @transform_0(%arg0: i32) -> (i32, i32, i32) {
    %c0_i32 = arith.constant 0 : i32
    %c0_i32_0 = arith.constant 0 : i32
    %c0_i32_1 = arith.constant 0 : i32
    return %arg0, %c0_i32, %c0_i32_0 : i32, i32, i32
  }
  func.func @transform_1(%arg0: i32) -> (i32, i32) {
    %c0_i32 = arith.constant 0 : i32
    %c0_i32_0 = arith.constant 0 : i32
    %c0_i32_1 = arith.constant 0 : i32
    return %c0_i32, %c0_i32_0 : i32, i32
  }
  func.func @transform_2(%arg0: i32) -> (i32, i32) {
    %c0_i32 = arith.constant 0 : i32
    %c0_i32_0 = arith.constant 0 : i32
    %c0_i32_1 = arith.constant 0 : i32
    return %c0_i32, %c0_i32_0 : i32, i32
  }
  func.func @transform_3(%arg0: i32) -> (i32, i32) {
    %c0_i32 = arith.constant 0 : i32
    %c0_i32_0 = arith.constant 0 : i32
    %c0_i32_1 = arith.constant 0 : i32
    return %c0_i32, %c0_i32_0 : i32, i32
  }
  func.func @transform_4(%arg0: i32) -> (i32, i32) {
    %c0_i32 = arith.constant 0 : i32
    %c0_i32_0 = arith.constant 0 : i32
    %c0_i32_1 = arith.constant 0 : i32
    return %c0_i32, %c0_i32_0 : i32, i32
  }
  func.func @transform_5(%arg0: i32) -> (i32, i32, i32) {
    %c0_i32 = arith.constant 0 : i32
    %c0_i32_0 = arith.constant 0 : i32
    %c0_i32_1 = arith.constant 0 : i32
    return %arg0, %c0_i32, %c0_i32_0 : i32, i32, i32
  }
}

</mosaic_0001>

<llo_original>
// kernel: tpu_custom_call.1
$region0: #{tpu_custom_call.1}
  #allocation0 [shape = 'u32[]', space=smem, size = 0x4, offset = 0x4, fixed_abs, tag = 'smem constant byte address 0x4 - core index']
  #allocation1 [shape = 'u32[144,128]{1,0:T(1,128)}', space=vmem, size = 0x12000, scoped, tag = 'internal scratch']
  #allocation2 [shape = 'f32[8,128]{1,0:T(8,128)}', space=vmem, size = 0x1000, scoped, tag = 'scratch operand']
  #allocation3 [shape = 'f32[8,8,128]{2,1,0:T(8,128)}', space=vmem, size = 0x8000, scoped, tag = 'scratch operand']
  %s0 = inlined_call_operand.hbm [shape: f32[8,8,128], index: 0, kind: input, shape index: {}]
  %s1 = inlined_call_operand.hbm [shape: f32[128,128], index: 1, kind: input, shape index: {}]
  %s2 = inlined_call_operand.hbm [shape: f32[128,128], index: 2, kind: input, shape index: {}]
  %s3 = inlined_call_operand.vmem [shape: f32[1,128], index: 3, kind: input, shape index: {}]
  %s4 = inlined_call_operand.vmem [shape: s32[8,1], index: 4, kind: input, shape index: {}]
  %s5 = inlined_call_operand.hbm [shape: f32[8,8,128], index: 5, kind: output, shape index: {}]
  %s6 = sld [smem:[#allocation0]]
  $region46: #{tpu_custom_call.1} parent=0
    _
  %s8 = ssub.s32 1, %s6
  %s9 = scalar_select 0, %s8, %s6
  $region1: #{tpu_custom_call.1} parent=0
    #allocation4 [shape = 'u8[32768]{0}', space=vmem, size = 0x8000, scoped, tag = 'input window, operand 0, single buffered']
    #allocation5 [shape = 's32[1]{0}', space=sflag, size = 0x4, scoped, tag = 'scoped memory for tpu_custom_call.1']
    #allocation6 [shape = 's32[1]{0}', space=sflag, size = 0x4, scoped, tag = 'scoped memory for tpu_custom_call.1']
    #allocation7 [shape = 'u8[65536]{0}', space=vmem, size = 0x10000, scoped, tag = 'input window, operand 1, single buffered']
    #allocation8 [shape = 's32[1]{0}', space=sflag, size = 0x4, scoped, tag = 'scoped memory for tpu_custom_call.1']
    #allocation9 [shape = 'u8[65536]{0}', space=vmem, size = 0x10000, scoped, tag = 'input window, operand 2, single buffered']
    #allocation10 [shape = 'u8[32768]{0}', space=vmem, size = 0x8000, scoped, tag = 'output window, operand 0, single buffered']
    %10 = vsyncpa [#allocation5], 0
    %11 = vsyncpa [#allocation8], 0
    %12 = vsyncpa [#allocation6], 0
    // Predicated region
    $region2: #{tpu_custom_call.1} parent=1 // pred_check
      _
    $region3: #{tpu_custom_call.1} parent=1 // pred_check_branch
      %14 = sbr.rel (0) target = $region5
    $region4: #{tpu_custom_call.1} parent=1 // pred_region
      %s16 = ssub.s32 1024, 1024
      %17 = vsyncadd [#allocation5], %s16
      %s18 = sshll.u32 [#allocation4], 4
      %s19 = int_to_ptr.vmem [resolvable:$true] %s18
      %24 = dma.hbm_to_vmem [thread:$0]  %s0, 1024, %s19, [#allocation5], 128, 128, 8
    $region5: #{tpu_custom_call.1} parent=1 // pred_fallthru
      _
    // Predicated region
    $region6: #{tpu_custom_call.1} parent=1 // pred_check
      _
    $region7: #{tpu_custom_call.1} parent=1 // pred_check_branch
      %26 = sbr.rel (0) target = $region9
    $region8: #{tpu_custom_call.1} parent=1 // pred_region
      %s28 = ssub.s32 2048, 2048
      %29 = vsyncadd [#allocation8], %s28
      %s30 = sshll.u32 [#allocation7], 4
      %s31 = int_to_ptr.vmem [resolvable:$true] %s30
      %36 = dma.hbm_to_vmem [thread:$0]  %s1, 2048, %s31, [#allocation8], 128, 128, 8
    $region9: #{tpu_custom_call.1} parent=1 // pred_fallthru
      _
    // Predicated region
    $region10: #{tpu_custom_call.1} parent=1 // pred_check
      _
    $region11: #{tpu_custom_call.1} parent=1 // pred_check_branch
      %38 = sbr.rel (0) target = $region13
    $region12: #{tpu_custom_call.1} parent=1 // pred_region
      %s40 = ssub.s32 2048, 2048
      %41 = vsyncadd [#allocation8], %s40
      %s42 = sshll.u32 [#allocation9], 4
      %s43 = int_to_ptr.vmem [resolvable:$true] %s42
      %48 = dma.hbm_to_vmem [thread:$0]  %s2, 2048, %s43, [#allocation8], 128, 128, 8
    $region13: #{tpu_custom_call.1} parent=1 // pred_fallthru
      _
    // Predicated region
    $region14: #{tpu_custom_call.1} parent=1 // pred_check
      _
    $region15: #{tpu_custom_call.1} parent=1 // pred_check_branch
      %50 = sbr.rel (0) target = $region17
    $region16: #{tpu_custom_call.1} parent=1 // pred_region
      _
    $region17: #{tpu_custom_call.1} parent=1 // pred_fallthru
      _
    // Predicated region
    $region18: #{tpu_custom_call.1} parent=1 // pred_check
      _
    $region19: #{tpu_custom_call.1} parent=1 // pred_check_branch
      %52 = sbr.rel (0) target = $region21
    $region20: #{tpu_custom_call.1} parent=1 // pred_region
      _
    $region21: #{tpu_custom_call.1} parent=1 // pred_fallthru
      _
    // Predicated region
    $region22: #{tpu_custom_call.1} parent=1 // pred_check
      _
    $region23: #{tpu_custom_call.1} parent=1 // pred_check_branch
      %54 = sbr.rel (0) target = $region25
    $region24: #{tpu_custom_call.1} parent=1 // pred_region
      %55 = dma.done [#allocation5], 1024
    $region25: #{tpu_custom_call.1} parent=1 // pred_fallthru
      _
    // Predicated region
    $region26: #{tpu_custom_call.1} parent=1 // pred_check
      _
    $region27: #{tpu_custom_call.1} parent=1 // pred_check_branch
      %57 = sbr.rel (0) target = $region29
    $region28: #{tpu_custom_call.1} parent=1 // pred_region
      %58 = dma.done [#allocation8], 2048
    $region29: #{tpu_custom_call.1} parent=1 // pred_fallthru
      _
    // Predicated region
    $region30: #{tpu_custom_call.1} parent=1 // pred_check
      _
    $region31: #{tpu_custom_call.1} parent=1 // pred_check_branch
      %60 = sbr.rel (0) target = $region33
    $region32: #{tpu_custom_call.1} parent=1 // pred_region
      %61 = dma.done [#allocation8], 2048
    $region33: #{tpu_custom_call.1} parent=1 // pred_fallthru
      _
    %p62 = scmp.eq.s32.totalorder 0, 0
    // Predicated region
    $region34: #{tpu_custom_call.1} parent=1 // pred_check
      %p63 = pneg %p62
    $region35: #{tpu_custom_call.1} parent=1 // pred_check_branch
      %65 = sbr.rel (%p63) target = $region37
    $region36: #{tpu_custom_call.1} parent=1 // pred_region
      %66 = vst [vmem:[#allocation2] sm:$0xff] 0.0
    $region37: #{tpu_custom_call.1} parent=1 // pred_fallthru
      _
    %v67 = vld [vmem:[#allocation4] sm:$0xff]
    %v68 = vld [vmem:[#allocation4 + $0x8] sm:$0xff]
    %v69 = vld [vmem:[#allocation4 + $0x10] sm:$0xff]
    %v70 = vld [vmem:[#allocation4 + $0x18] sm:$0xff]
    %v71 = vld [vmem:[#allocation4 + $0x20] sm:$0xff]
    %v72 = vld [vmem:[#allocation4 + $0x28] sm:$0xff]
    %v73 = vld [vmem:[#allocation4 + $0x30] sm:$0xff]
    %v74 = vld [vmem:[#allocation4 + $0x38] sm:$0xff]
    %v75 = vld [vmem:[#allocation7] sm:$0xff]
    %v76 = vld [vmem:[#allocation7 + $0x8] sm:$0xff]
    %v77 = vld [vmem:[#allocation7 + $0x10] sm:$0xff]
    %v78 = vld [vmem:[#allocation7 + $0x18] sm:$0xff]
    %v79 = vld [vmem:[#allocation7 + $0x20] sm:$0xff]
    %v80 = vld [vmem:[#allocation7 + $0x28] sm:$0xff]
    %v81 = vld [vmem:[#allocation7 + $0x30] sm:$0xff]
    %v82 = vld [vmem:[#allocation7 + $0x38] sm:$0xff]
    %v83 = vld [vmem:[#allocation7 + $0x40] sm:$0xff]
    %v84 = vld [vmem:[#allocation7 + $0x48] sm:$0xff]
    %v85 = vld [vmem:[#allocation7 + $0x50] sm:$0xff]
    %v86 = vld [vmem:[#allocation7 + $0x58] sm:$0xff]
    %v87 = vld [vmem:[#allocation7 + $0x60] sm:$0xff]
    %v88 = vld [vmem:[#allocation7 + $0x68] sm:$0xff]
    %v89 = vld [vmem:[#allocation7 + $0x70] sm:$0xff]
    %v90 = vld [vmem:[#allocation7 + $0x78] sm:$0xff]
    %v91 = vld [vmem:[%s3] sm:$0x1]
    %v93 = vlaneseq
    %v94 = vshrl.u32 %v93, 7
    %v95 = vsub.s32 0, %v94
    %v96 = vrot.slane %v91, %v95
    %98 = vmatprep.subr.mxu0 0.0
    %99 = vmatpush1.msra.mxu0 %v75
    %100 = vmatprep.subr.mxu0 0.0
    %101 = vmatpush1.msra.mxu0 %v76
    %102 = vmatprep.subr.mxu0 0.0
    %103 = vmatpush1.msra.mxu0 %v77
    %104 = vmatprep.subr.mxu0 0.0
    %105 = vmatpush1.msra.mxu0 %v78
    %106 = vmatprep.subr.mxu0 0.0
    %107 = vmatpush1.msra.mxu0 %v79
    %108 = vmatprep.subr.mxu0 0.0
    %109 = vmatpush1.msra.mxu0 %v80
    %110 = vmatprep.subr.mxu0 0.0
    %111 = vmatpush1.msra.mxu0 %v81
    %112 = vmatprep.subr.mxu0 0.0
    %113 = vmatpush1.msra.mxu0 %v82
    %114 = vmatprep.subr.mxu0 0.0
    %115 = vmatpush1.msra.mxu0 %v83
    %116 = vmatprep.subr.mxu0 0.0
    %117 = vmatpush1.msra.mxu0 %v84
    %118 = vmatprep.subr.mxu0 0.0
    %119 = vmatpush1.msra.mxu0 %v85
    %120 = vmatprep.subr.mxu0 0.0
    %121 = vmatpush1.msra.mxu0 %v86
    %122 = vmatprep.subr.mxu0 0.0
    %123 = vmatpush1.msra.mxu0 %v87
    %124 = vmatprep.subr.mxu0 0.0
    %125 = vmatpush1.msra.mxu0 %v88
    %126 = vmatprep.subr.mxu0 0.0
    %127 = vmatpush1.msra.mxu0 %v89
    %128 = vmatprep.subr.mxu0 0.0
    %129 = vmatpush1.msra.mxu0 %v90
    %130 = vmatprep.subr.mxu0 0.0
    %131 = vmatpush1.msra.mxu0 0.0
    %132 = vmatprep.subr.mxu0 0.0
    %133 = vmatpush1.msra.mxu0 0.0
    %134 = vmatprep.subr.mxu0 0.0
    %135 = vmatpush1.msra.mxu0 0.0
    %136 = vmatprep.subr.mxu0 0.0
    %137 = vmatpush1.msra.mxu0 0.0
    %138 = vmatprep.subr.mxu0 0.0
    %139 = vmatpush1.msra.mxu0 0.0
    %140 = vmatprep.subr.mxu0 0.0
    %141 = vmatpush1.msra.mxu0 0.0
    %142 = vmatprep.subr.mxu0 0.0
    %143 = vmatpush1.msra.mxu0 0.0
    %144 = vmatprep.subr.mxu0 0.0
    %145 = vmatpush1.msra.mxu0 0.0
    %146 = vmatprep.subr.mxu0 0.0
    %147 = vmatpush1.msra.mxu0 0.0
    %148 = vmatprep.subr.mxu0 0.0
    %149 = vmatpush1.msra.mxu0 0.0
    %150 = vmatprep.subr.mxu0 0.0
    %151 = vmatpush1.msra.mxu0 0.0
    %152 = vmatprep.subr.mxu0 0.0
    %153 = vmatpush1.msra.mxu0 0.0
    %154 = vmatprep.subr.mxu0 0.0
    %155 = vmatpush1.msra.mxu0 0.0
    %156 = vmatprep.subr.mxu0 0.0
    %157 = vmatpush1.msra.mxu0 0.0
    %158 = vmatprep.subr.mxu0 0.0
    %159 = vmatpush1.msra.mxu0 0.0
    %160 = vmatprep.subr.mxu0 0.0
    %161 = vmatpush1.msra.mxu0 0.0
    %162 = vmatprep.mubr.f32.mxu0 0.0
    %163 = vmatmul.mubr.f32.gmra.mrb[0].mxu0 %v67
    %v164 = vpop.f32.mrb[0].mxu0
    %v165 = vadd.f32 %v96, %v164
    %v166 = vpop.f32.mrb[0].mxu0
    %167 = vmatprep.mubr.f32.mxu0 0.0
    %168 = vmatmul.mubr.f32.gmra.mrb[0].mxu0 %v68
    %v169 = vpop.f32.mrb[0].mxu0
    %v170 = vadd.f32 %v96, %v169
    %v171 = vpop.f32.mrb[0].mxu0
    %172 = vmatprep.mubr.f32.mxu0 0.0
    %173 = vmatmul.mubr.f32.gmra.mrb[0].mxu0 %v69
    %v174 = vpop.f32.mrb[0].mxu0
    %v175 = vadd.f32 %v96, %v174
    %v176 = vpop.f32.mrb[0].mxu0
    %177 = vmatprep.mubr.f32.mxu0 0.0
    %178 = vmatmul.mubr.f32.gmra.mrb[0].mxu0 %v70
    %v179 = vpop.f32.mrb[0].mxu0
    %v180 = vadd.f32 %v96, %v179
    %v181 = vpop.f32.mrb[0].mxu0
    %182 = vmatprep.mubr.f32.mxu0 0.0
    %183 = vmatmul.mubr.f32.gmra.mrb[0].mxu0 %v71
    %v184 = vpop.f32.mrb[0].mxu0
    %v185 = vadd.f32 %v96, %v184
    %v186 = vpop.f32.mrb[0].mxu0
    %187 = vmatprep.mubr.f32.mxu0 0.0
    %188 = vmatmul.mubr.f32.gmra.mrb[0].mxu0 %v72
    %v189 = vpop.f32.mrb[0].mxu0
    %v190 = vadd.f32 %v96, %v189
    %v191 = vpop.f32.mrb[0].mxu0
    %192 = vmatprep.mubr.f32.mxu0 0.0
    %193 = vmatmul.mubr.f32.gmra.mrb[0].mxu0 %v73
    %v194 = vpop.f32.mrb[0].mxu0
    %v195 = vadd.f32 %v96, %v194
    %v196 = vpop.f32.mrb[0].mxu0
    %197 = vmatprep.mubr.f32.mxu0 0.0
    %198 = vmatmul.mubr.f32.gmra.mrb[0].mxu0 %v74
    %v199 = vpop.f32.mrb[0].mxu0
    %v200 = vadd.f32 %v96, %v199
    %v201 = vpop.f32.mrb[0].mxu0
    %202 = vdwg.mxu0
    %203 = vst [vmem:[#allocation3] sm:$0xff] %v165
    %204 = vst [vmem:[#allocation3 + $0x8] sm:$0xff] %v170
    %205 = vst [vmem:[#allocation3 + $0x10] sm:$0xff] %v175
    %206 = vst [vmem:[#allocation3 + $0x18] sm:$0xff] %v180
    %207 = vst [vmem:[#allocation3 + $0x20] sm:$0xff] %v185
    %208 = vst [vmem:[#allocation3 + $0x28] sm:$0xff] %v190
    %209 = vst [vmem:[#allocation3 + $0x30] sm:$0xff] %v195
    %210 = vst [vmem:[#allocation3 + $0x38] sm:$0xff] %v200
    %v211 = vld [vmem:[%s4] sm:$0xff]
    %v212 = vld [vmem:[#allocation9] sm:$0xff]
    %v213 = vld [vmem:[#allocation9 + $0x8] sm:$0xff]
    %v214 = vld [vmem:[#allocation9 + $0x10] sm:$0xff]
    %v215 = vld [vmem:[#allocation9 + $0x18] sm:$0xff]
    %v216 = vld [vmem:[#allocation9 + $0x20] sm:$0xff]
    %v217 = vld [vmem:[#allocation9 + $0x28] sm:$0xff]
    %v218 = vld [vmem:[#allocation9 + $0x30] sm:$0xff]
    %v219 = vld [vmem:[#allocation9 + $0x38] sm:$0xff]
    %v220 = vld [vmem:[#allocation9 + $0x40] sm:$0xff]
    %v221 = vld [vmem:[#allocation9 + $0x48] sm:$0xff]
    %v222 = vld [vmem:[#allocation9 + $0x50] sm:$0xff]
    %v223 = vld [vmem:[#allocation9 + $0x58] sm:$0xff]
    %v224 = vld [vmem:[#allocation9 + $0x60] sm:$0xff]
    %v225 = vld [vmem:[#allocation9 + $0x68] sm:$0xff]
    %v226 = vld [vmem:[#allocation9 + $0x70] sm:$0xff]
    %v227 = vld [vmem:[#allocation9 + $0x78] sm:$0xff]
    %s228 = smul.u32 0, 8
    %v229 = vld [vmem:[#allocation2] sm:$0xff]
    %v230 = vld [vmem:[#allocation3] sm:$0xff]
    %231 = vmatprep.subr.mxu0 0.0
    %232 = vmatpush1.msra.mxu0 %v212
    %233 = vmatprep.subr.mxu0 0.0
    %234 = vmatpush1.msra.mxu0 %v213
    %235 = vmatprep.subr.mxu0 0.0
    %236 = vmatpush1.msra.mxu0 %v214
    %237 = vmatprep.subr.mxu0 0.0
    %238 = vmatpush1.msra.mxu0 %v215
    %239 = vmatprep.subr.mxu0 0.0
    %240 = vmatpush1.msra.mxu0 %v216
    %241 = vmatprep.subr.mxu0 0.0
    %242 = vmatpush1.msra.mxu0 %v217
    %243 = vmatprep.subr.mxu0 0.0
    %244 = vmatpush1.msra.mxu0 %v218
    %245 = vmatprep.subr.mxu0 0.0
    %246 = vmatpush1.msra.mxu0 %v219
    %247 = vmatprep.subr.mxu0 0.0
    %248 = vmatpush1.msra.mxu0 %v220
    %249 = vmatprep.subr.mxu0 0.0
    %250 = vmatpush1.msra.mxu0 %v221
    %251 = vmatprep.subr.mxu0 0.0
    %252 = vmatpush1.msra.mxu0 %v222
    %253 = vmatprep.subr.mxu0 0.0
    %254 = vmatpush1.msra.mxu0 %v223
    %255 = vmatprep.subr.mxu0 0.0
    %256 = vmatpush1.msra.mxu0 %v224
    %257 = vmatprep.subr.mxu0 0.0
    %258 = vmatpush1.msra.mxu0 %v225
    %259 = vmatprep.subr.mxu0 0.0
    %260 = vmatpush1.msra.mxu0 %v226
    %261 = vmatprep.subr.mxu0 0.0
    %262 = vmatpush1.msra.mxu0 %v227
    %263 = vmatprep.subr.mxu0 0.0
    %264 = vmatpush1.msra.mxu0 0.0
    %265 = vmatprep.subr.mxu0 0.0
    %266 = vmatpush1.msra.mxu0 0.0
    %267 = vmatprep.subr.mxu0 0.0
    %268 = vmatpush1.msra.mxu0 0.0
    %269 = vmatprep.subr.mxu0 0.0
    %270 = vmatpush1.msra.mxu0 0.0
    %271 = vmatprep.subr.mxu0 0.0
    %272 = vmatpush1.msra.mxu0 0.0
    %273 = vmatprep.subr.mxu0 0.0
    %274 = vmatpush1.msra.mxu0 0.0
    %275 = vmatprep.subr.mxu0 0.0
    %276 = vmatpush1.msra.mxu0 0.0
    %277 = vmatprep.subr.mxu0 0.0
    %278 = vmatpush1.msra.mxu0 0.0
    %279 = vmatprep.subr.mxu0 0.0
    %280 = vmatpush1.msra.mxu0 0.0
    %281 = vmatprep.subr.mxu0 0.0
    %282 = vmatpush1.msra.mxu0 0.0
    %283 = vmatprep.subr.mxu0 0.0
    %284 = vmatpush1.msra.mxu0 0.0
    %285 = vmatprep.subr.mxu0 0.0
    %286 = vmatpush1.msra.mxu0 0.0
    %287 = vmatprep.subr.mxu0 0.0
    %288 = vmatpush1.msra.mxu0 0.0
    %289 = vmatprep.subr.mxu0 0.0
    %290 = vmatpush1.msra.mxu0 0.0
    %291 = vmatprep.subr.mxu0 0.0
    %292 = vmatpush1.msra.mxu0 0.0
    %293 = vmatprep.subr.mxu0 0.0
    %294 = vmatpush1.msra.mxu0 0.0
    %295 = vmatprep.mubr.f32.mxu0 0.0
    %296 = vmatmul.mubr.f32.gmra.mrb[0].mxu0 %v229
    %v297 = vpop.f32.mrb[0].mxu0
    %v298 = vadd.f32 0.0, %v297
    %v299 = vpop.f32.mrb[0].mxu0
    %300 = vdwg.mxu0
    %v301 = vadd.f32 %v230, %v298
    %v302 = vtanh.pop %v301
    %v303 = vstv %s228
    %vm304 = vcmp.lt.s32.totalorder %v303, %v211
    %v305 = vsel %vm304, 1, 0
    %306 = vset.pattern.permute.xlu0 0
    %307 = vperm.xlu0 %306, %v305
    %v308 = vpop.permute.xlu0 %307
    %vm309 = vcmp.eq.s32.totalorder %v308, 1
    %v310 = vsel %vm309, %v302, 0.0
    %311 = vst [vmem:[#allocation10] sm:$0xff] %v310
    %v312 = vsel %vm309, %v302, %v229
    %s313 = scalar_lea.vmem [#allocation3], 8
    %v314 = vld [vmem:[%s313] sm:$0xff]
    %315 = vmatprep.subr.mxu0 0.0
    %316 = vmatpush1.msra.mxu0 %v212
    %317 = vmatprep.subr.mxu0 0.0
    %318 = vmatpush1.msra.mxu0 %v213
    %319 = vmatprep.subr.mxu0 0.0
    %320 = vmatpush1.msra.mxu0 %v214
    %321 = vmatprep.subr.mxu0 0.0
    %322 = vmatpush1.msra.mxu0 %v215
    %323 = vmatprep.subr.mxu0 0.0
    %324 = vmatpush1.msra.mxu0 %v216
    %325 = vmatprep.subr.mxu0 0.0
    %326 = vmatpush1.msra.mxu0 %v217
    %327 = vmatprep.subr.mxu0 0.0
    %328 = vmatpush1.msra.mxu0 %v218
    %329 = vmatprep.subr.mxu0 0.0
    %330 = vmatpush1.msra.mxu0 %v219
    %331 = vmatprep.subr.mxu0 0.0
    %332 = vmatpush1.msra.mxu0 %v220
    %333 = vmatprep.subr.mxu0 0.0
    %334 = vmatpush1.msra.mxu0 %v221
    %335 = vmatprep.subr.mxu0 0.0
    %336 = vmatpush1.msra.mxu0 %v222
    %337 = vmatprep.subr.mxu0 0.0
    %338 = vmatpush1.msra.mxu0 %v223
    %339 = vmatprep.subr.mxu0 0.0
    %340 = vmatpush1.msra.mxu0 %v224
    %341 = vmatprep.subr.mxu0 0.0
    %342 = vmatpush1.msra.mxu0 %v225
    %343 = vmatprep.subr.mxu0 0.0
    %344 = vmatpush1.msra.mxu0 %v226
    %345 = vmatprep.subr.mxu0 0.0
    %346 = vmatpush1.msra.mxu0 %v227
    %347 = vmatprep.subr.mxu0 0.0
    %348 = vmatpush1.msra.mxu0 0.0
    %349 = vmatprep.subr.mxu0 0.0
    %350 = vmatpush1.msra.mxu0 0.0
    %351 = vmatprep.subr.mxu0 0.0
    %352 = vmatpush1.msra.mxu0 0.0
    %353 = vmatprep.subr.mxu0 0.0
    %354 = vmatpush1.msra.mxu0 0.0
    %355 = vmatprep.subr.mxu0 0.0
    %356 = vmatpush1.msra.mxu0 0.0
    %357 = vmatprep.subr.mxu0 0.0
    %358 = vmatpush1.msra.mxu0 0.0
    %359 = vmatprep.subr.mxu0 0.0
    %360 = vmatpush1.msra.mxu0 0.0
    %361 = vmatprep.subr.mxu0 0.0
    %362 = vmatpush1.msra.mxu0 0.0
    %363 = vmatprep.subr.mxu0 0.0
    %364 = vmatpush1.msra.mxu0 0.0
    %365 = vmatprep.subr.mxu0 0.0
    %366 = vmatpush1.msra.mxu0 0.0
    %367 = vmatprep.subr.mxu0 0.0
    %368 = vmatpush1.msra.mxu0 0.0
    %369 = vmatprep.subr.mxu0 0.0
    %370 = vmatpush1.msra.mxu0 0.0
    %371 = vmatprep.subr.mxu0 0.0
    %372 = vmatpush1.msra.mxu0 0.0
    %373 = vmatprep.subr.mxu0 0.0
    %374 = vmatpush1.msra.mxu0 0.0
    %375 = vmatprep.subr.mxu0 0.0
    %376 = vmatpush1.msra.mxu0 0.0
    %377 = vmatprep.subr.mxu0 0.0
    %378 = vmatpush1.msra.mxu0 0.0
    %379 = vmatprep.mubr.f32.mxu0 0.0
    %380 = vmatmul.mubr.f32.gmra.mrb[0].mxu0 %v312
    %v381 = vpop.f32.mrb[0].mxu0
    %v382 = vadd.f32 0.0, %v381
    %v383 = vpop.f32.mrb[0].mxu0
    %384 = vdwg.mxu0
    %v385 = vadd.f32 %v314, %v382
    %v386 = vtanh.pop %v385
    %s387 = sadd.s32 %s228, 1
    %v388 = vstv %s387
    %vm389 = vcmp.lt.s32.totalorder %v388, %v211
    %v390 = vsel %vm389, 1, 0
    %391 = vset.pattern.permute.xlu0 0
    %392 = vperm.xlu0 %391, %v390
    %v393 = vpop.permute.xlu0 %392
    %vm394 = vcmp.eq.s32.totalorder %v393, 1
    %v395 = vsel %vm394, %v386, 0.0
    %s396 = scalar_lea.vmem [#allocation10], 8
    %397 = vst [vmem:[%s396] sm:$0xff] %v395
    %v398 = vsel %vm394, %v386, %v312
    %s399 = scalar_lea.vmem [#allocation3], 16
    %v400 = vld [vmem:[%s399] sm:$0xff]
    %401 = vmatprep.subr.mxu0 0.0
    %402 = vmatpush1.msra.mxu0 %v212
    %403 = vmatprep.subr.mxu0 0.0
    %404 = vmatpush1.msra.mxu0 %v213
    %405 = vmatprep.subr.mxu0 0.0
    %406 = vmatpush1.msra.mxu0 %v214
    %407 = vmatprep.subr.mxu0 0.0
    %408 = vmatpush1.msra.mxu0 %v215
    %409 = vmatprep.subr.mxu0 0.0
    %410 = vmatpush1.msra.mxu0 %v216
    %411 = vmatprep.subr.mxu0 0.0
    %412 = vmatpush1.msra.mxu0 %v217
    %413 = vmatprep.subr.mxu0 0.0
    %414 = vmatpush1.msra.mxu0 %v218
    %415 = vmatprep.subr.mxu0 0.0
    %416 = vmatpush1.msra.mxu0 %v219
    %417 = vmatprep.subr.mxu0 0.0
    %418 = vmatpush1.msra.mxu0 %v220
    %419 = vmatprep.subr.mxu0 0.0
    %420 = vmatpush1.msra.mxu0 %v221
    %421 = vmatprep.subr.mxu0 0.0
    %422 = vmatpush1.msra.mxu0 %v222
    %423 = vmatprep.subr.mxu0 0.0
    %424 = vmatpush1.msra.mxu0 %v223
    %425 = vmatprep.subr.mxu0 0.0
    %426 = vmatpush1.msra.mxu0 %v224
    %427 = vmatprep.subr.mxu0 0.0
    %428 = vmatpush1.msra.mxu0 %v225
    %429 = vmatprep.subr.mxu0 0.0
    %430 = vmatpush1.msra.mxu0 %v226
    %431 = vmatprep.subr.mxu0 0.0
    %432 = vmatpush1.msra.mxu0 %v227
    %433 = vmatprep.subr.mxu0 0.0
    %434 = vmatpush1.msra.mxu0 0.0
    %435 = vmatprep.subr.mxu0 0.0
    %436 = vmatpush1.msra.mxu0 0.0
    %437 = vmatprep.subr.mxu0 0.0
    %438 = vmatpush1.msra.mxu0 0.0
    %439 = vmatprep.subr.mxu0 0.0
    %440 = vmatpush1.msra.mxu0 0.0
    %441 = vmatprep.subr.mxu0 0.0
    %442 = vmatpush1.msra.mxu0 0.0
    %443 = vmatprep.subr.mxu0 0.0
    %444 = vmatpush1.msra.mxu0 0.0
    %445 = vmatprep.subr.mxu0 0.0
    %446 = vmatpush1.msra.mxu0 0.0
    %447 = vmatprep.subr.mxu0 0.0
    %448 = vmatpush1.msra.mxu0 0.0
    %449 = vmatprep.subr.mxu0 0.0
    %450 = vmatpush1.msra.mxu0 0.0
    %451 = vmatprep.subr.mxu0 0.0
    %452 = vmatpush1.msra.mxu0 0.0
    %453 = vmatprep.subr.mxu0 0.0
    %454 = vmatpush1.msra.mxu0 0.0
    %455 = vmatprep.subr.mxu0 0.0
    %456 = vmatpush1.msra.mxu0 0.0
    %457 = vmatprep.subr.mxu0 0.0
    %458 = vmatpush1.msra.mxu0 0.0
    %459 = vmatprep.subr.mxu0 0.0
    %460 = vmatpush1.msra.mxu0 0.0
    %461 = vmatprep.subr.mxu0 0.0
    %462 = vmatpush1.msra.mxu0 0.0
    %463 = vmatprep.subr.mxu0 0.0
    %464 = vmatpush1.msra.mxu0 0.0
    %465 = vmatprep.mubr.f32.mxu0 0.0
    %466 = vmatmul.mubr.f32.gmra.mrb[0].mxu0 %v398
    %v467 = vpop.f32.mrb[0].mxu0
    %v468 = vadd.f32 0.0, %v467
    %v469 = vpop.f32.mrb[0].mxu0
    %470 = vdwg.mxu0
    %v471 = vadd.f32 %v400, %v468
    %v472 = vtanh.pop %v471
    %s473 = sadd.s32 %s228, 2
    %v474 = vstv %s473
    %vm475 = vcmp.lt.s32.totalorder %v474, %v211
    %v476 = vsel %vm475, 1, 0
    %477 = vset.pattern.permute.xlu0 0
    %478 = vperm.xlu0 %477, %v476
    %v479 = vpop.permute.xlu0 %478
    %vm480 = vcmp.eq.s32.totalorder %v479, 1
    %v481 = vsel %vm480, %v472, 0.0
    %s482 = scalar_lea.vmem [#allocation10], 16
    %483 = vst [vmem:[%s482] sm:$0xff] %v481
    %v484 = vsel %vm480, %v472, %v398
    %s485 = scalar_lea.vmem [#allocation3], 24
    %v486 = vld [vmem:[%s485] sm:$0xff]
    %487 = vmatprep.subr.mxu0 0.0
    %488 = vmatpush1.msra.mxu0 %v212
    %489 = vmatprep.subr.mxu0 0.0
    %490 = vmatpush1.msra.mxu0 %v213
    %491 = vmatprep.subr.mxu0 0.0
    %492 = vmatpush1.msra.mxu0 %v214
    %493 = vmatprep.subr.mxu0 0.0
    %494 = vmatpush1.msra.mxu0 %v215
    %495 = vmatprep.subr.mxu0 0.0
    %496 = vmatpush1.msra.mxu0 %v216
    %497 = vmatprep.subr.mxu0 0.0
    %498 = vmatpush1.msra.mxu0 %v217
    %499 = vmatprep.subr.mxu0 0.0
    %500 = vmatpush1.msra.mxu0 %v218
    %501 = vmatprep.subr.mxu0 0.0
    %502 = vmatpush1.msra.mxu0 %v219
    %503 = vmatprep.subr.mxu0 0.0
    %504 = vmatpush1.msra.mxu0 %v220
    %505 = vmatprep.subr.mxu0 0.0
    %506 = vmatpush1.msra.mxu0 %v221
    %507 = vmatprep.subr.mxu0 0.0
    %508 = vmatpush1.msra.mxu0 %v222
    %509 = vmatprep.subr.mxu0 0.0
    %510 = vmatpush1.msra.mxu0 %v223
    %511 = vmatprep.subr.mxu0 0.0
    %512 = vmatpush1.msra.mxu0 %v224
    %513 = vmatprep.subr.mxu0 0.0
    %514 = vmatpush1.msra.mxu0 %v225
    %515 = vmatprep.subr.mxu0 0.0
    %516 = vmatpush1.msra.mxu0 %v226
    %517 = vmatprep.subr.mxu0 0.0
    %518 = vmatpush1.msra.mxu0 %v227
    %519 = vmatprep.subr.mxu0 0.0
    %520 = vmatpush1.msra.mxu0 0.0
    %521 = vmatprep.subr.mxu0 0.0
    %522 = vmatpush1.msra.mxu0 0.0
    %523 = vmatprep.subr.mxu0 0.0
    %524 = vmatpush1.msra.mxu0 0.0
    %525 = vmatprep.subr.mxu0 0.0
    %526 = vmatpush1.msra.mxu0 0.0
    %527 = vmatprep.subr.mxu0 0.0
    %528 = vmatpush1.msra.mxu0 0.0
    %529 = vmatprep.subr.mxu0 0.0
    %530 = vmatpush1.msra.mxu0 0.0
    %531 = vmatprep.subr.mxu0 0.0
    %532 = vmatpush1.msra.mxu0 0.0
    %533 = vmatprep.subr.mxu0 0.0
    %534 = vmatpush1.msra.mxu0 0.0
    %535 = vmatprep.subr.mxu0 0.0
    %536 = vmatpush1.msra.mxu0 0.0
    %537 = vmatprep.subr.mxu0 0.0
    %538 = vmatpush1.msra.mxu0 0.0
    %539 = vmatprep.subr.mxu0 0.0
    %540 = vmatpush1.msra.mxu0 0.0
    %541 = vmatprep.subr.mxu0 0.0
    %542 = vmatpush1.msra.mxu0 0.0
    %543 = vmatprep.subr.mxu0 0.0
    %544 = vmatpush1.msra.mxu0 0.0
    %545 = vmatprep.subr.mxu0 0.0
    %546 = vmatpush1.msra.mxu0 0.0
    %547 = vmatprep.subr.mxu0 0.0
    %548 = vmatpush1.msra.mxu0 0.0
    %549 = vmatprep.subr.mxu0 0.0
    %550 = vmatpush1.msra.mxu0 0.0
    %551 = vmatprep.mubr.f32.mxu0 0.0
    %552 = vmatmul.mubr.f32.gmra.mrb[0].mxu0 %v484
    %v553 = vpop.f32.mrb[0].mxu0
    %v554 = vadd.f32 0.0, %v553
    %v555 = vpop.f32.mrb[0].mxu0
    %556 = vdwg.mxu0
    %v557 = vadd.f32 %v486, %v554
    %v558 = vtanh.pop %v557
    %s559 = sadd.s32 %s228, 3
    %v560 = vstv %s559
    %vm561 = vcmp.lt.s32.totalorder %v560, %v211
    %v562 = vsel %vm561, 1, 0
    %563 = vset.pattern.permute.xlu0 0
    %564 = vperm.xlu0 %563, %v562
    %v565 = vpop.permute.xlu0 %564
    %vm566 = vcmp.eq.s32.totalorder %v565, 1
    %v567 = vsel %vm566, %v558, 0.0
    %s568 = scalar_lea.vmem [#allocation10], 24
    %569 = vst [vmem:[%s568] sm:$0xff] %v567
    %v570 = vsel %vm566, %v558, %v484
    %s571 = scalar_lea.vmem [#allocation3], 32
    %v572 = vld [vmem:[%s571] sm:$0xff]
    %573 = vmatprep.subr.mxu0 0.0
    %574 = vmatpush1.msra.mxu0 %v212
    %575 = vmatprep.subr.mxu0 0.0
    %576 = vmatpush1.msra.mxu0 %v213
    %577 = vmatprep.subr.mxu0 0.0
    %578 = vmatpush1.msra.mxu0 %v214
    %579 = vmatprep.subr.mxu0 0.0
    %580 = vmatpush1.msra.mxu0 %v215
    %581 = vmatprep.subr.mxu0 0.0
    %582 = vmatpush1.msra.mxu0 %v216
    %583 = vmatprep.subr.mxu0 0.0
    %584 = vmatpush1.msra.mxu0 %v217
    %585 = vmatprep.subr.mxu0 0.0
    %586 = vmatpush1.msra.mxu0 %v218
    %587 = vmatprep.subr.mxu0 0.0
    %588 = vmatpush1.msra.mxu0 %v219
    %589 = vmatprep.subr.mxu0 0.0
    %590 = vmatpush1.msra.mxu0 %v220
    %591 = vmatprep.subr.mxu0 0.0
    %592 = vmatpush1.msra.mxu0 %v221
    %593 = vmatprep.subr.mxu0 0.0
    %594 = vmatpush1.msra.mxu0 %v222
    %595 = vmatprep.subr.mxu0 0.0
    %596 = vmatpush1.msra.mxu0 %v223
    %597 = vmatprep.subr.mxu0 0.0
    %598 = vmatpush1.msra.mxu0 %v224
    %599 = vmatprep.subr.mxu0 0.0
    %600 = vmatpush1.msra.mxu0 %v225
    %601 = vmatprep.subr.mxu0 0.0
    %602 = vmatpush1.msra.mxu0 %v226
    %603 = vmatprep.subr.mxu0 0.0
    %604 = vmatpush1.msra.mxu0 %v227
    %605 = vmatprep.subr.mxu0 0.0
    %606 = vmatpush1.msra.mxu0 0.0
    %607 = vmatprep.subr.mxu0 0.0
    %608 = vmatpush1.msra.mxu0 0.0
    %609 = vmatprep.subr.mxu0 0.0
    %610 = vmatpush1.msra.mxu0 0.0
    %611 = vmatprep.subr.mxu0 0.0
    %612 = vmatpush1.msra.mxu0 0.0
    %613 = vmatprep.subr.mxu0 0.0
    %614 = vmatpush1.msra.mxu0 0.0
    %615 = vmatprep.subr.mxu0 0.0
    %616 = vmatpush1.msra.mxu0 0.0
    %617 = vmatprep.subr.mxu0 0.0
    %618 = vmatpush1.msra.mxu0 0.0
    %619 = vmatprep.subr.mxu0 0.0
    %620 = vmatpush1.msra.mxu0 0.0
    %621 = vmatprep.subr.mxu0 0.0
    %622 = vmatpush1.msra.mxu0 0.0
    %623 = vmatprep.subr.mxu0 0.0
    %624 = vmatpush1.msra.mxu0 0.0
    %625 = vmatprep.subr.mxu0 0.0
    %626 = vmatpush1.msra.mxu0 0.0
    %627 = vmatprep.subr.mxu0 0.0
    %628 = vmatpush1.msra.mxu0 0.0
    %629 = vmatprep.subr.mxu0 0.0
    %630 = vmatpush1.msra.mxu0 0.0
    %631 = vmatprep.subr.mxu0 0.0
    %632 = vmatpush1.msra.mxu0 0.0
    %633 = vmatprep.subr.mxu0 0.0
    %634 = vmatpush1.msra.mxu0 0.0
    %635 = vmatprep.subr.mxu0 0.0
    %636 = vmatpush1.msra.mxu0 0.0
    %637 = vmatprep.mubr.f32.mxu0 0.0
    %638 = vmatmul.mubr.f32.gmra.mrb[0].mxu0 %v570
    %v639 = vpop.f32.mrb[0].mxu0
    %v640 = vadd.f32 0.0, %v639
    %v641 = vpop.f32.mrb[0].mxu0
    %642 = vdwg.mxu0
    %v643 = vadd.f32 %v572, %v640
    %v644 = vtanh.pop %v643
    %s645 = sadd.s32 %s228, 4
    %v646 = vstv %s645
    %vm647 = vcmp.lt.s32.totalorder %v646, %v211
    %v648 = vsel %vm647, 1, 0
    %649 = vset.pattern.permute.xlu0 0
    %650 = vperm.xlu0 %649, %v648
    %v651 = vpop.permute.xlu0 %650
    %vm652 = vcmp.eq.s32.totalorder %v651, 1
    %v653 = vsel %vm652, %v644, 0.0
    %s654 = scalar_lea.vmem [#allocation10], 32
    %655 = vst [vmem:[%s654] sm:$0xff] %v653
    %v656 = vsel %vm652, %v644, %v570
    %s657 = scalar_lea.vmem [#allocation3], 40
    %v658 = vld [vmem:[%s657] sm:$0xff]
    %659 = vmatprep.subr.mxu0 0.0
    %660 = vmatpush1.msra.mxu0 %v212
    %661 = vmatprep.subr.mxu0 0.0
    %662 = vmatpush1.msra.mxu0 %v213
    %663 = vmatprep.subr.mxu0 0.0
    %664 = vmatpush1.msra.mxu0 %v214
    %665 = vmatprep.subr.mxu0 0.0
    %666 = vmatpush1.msra.mxu0 %v215
    %667 = vmatprep.subr.mxu0 0.0
    %668 = vmatpush1.msra.mxu0 %v216
    %669 = vmatprep.subr.mxu0 0.0
    %670 = vmatpush1.msra.mxu0 %v217
    %671 = vmatprep.subr.mxu0 0.0
    %672 = vmatpush1.msra.mxu0 %v218
    %673 = vmatprep.subr.mxu0 0.0
    %674 = vmatpush1.msra.mxu0 %v219
    %675 = vmatprep.subr.mxu0 0.0
    %676 = vmatpush1.msra.mxu0 %v220
    %677 = vmatprep.subr.mxu0 0.0
    %678 = vmatpush1.msra.mxu0 %v221
    %679 = vmatprep.subr.mxu0 0.0
    %680 = vmatpush1.msra.mxu0 %v222
    %681 = vmatprep.subr.mxu0 0.0
    %682 = vmatpush1.msra.mxu0 %v223
    %683 = vmatprep.subr.mxu0 0.0
    %684 = vmatpush1.msra.mxu0 %v224
    %685 = vmatprep.subr.mxu0 0.0
    %686 = vmatpush1.msra.mxu0 %v225
    %687 = vmatprep.subr.mxu0 0.0
    %688 = vmatpush1.msra.mxu0 %v226
    %689 = vmatprep.subr.mxu0 0.0
    %690 = vmatpush1.msra.mxu0 %v227
    %691 = vmatprep.subr.mxu0 0.0
    %692 = vmatpush1.msra.mxu0 0.0
    %693 = vmatprep.subr.mxu0 0.0
    %694 = vmatpush1.msra.mxu0 0.0
    %695 = vmatprep.subr.mxu0 0.0
    %696 = vmatpush1.msra.mxu0 0.0
    %697 = vmatprep.subr.mxu0 0.0
    %698 = vmatpush1.msra.mxu0 0.0
    %699 = vmatprep.subr.mxu0 0.0
    %700 = vmatpush1.msra.mxu0 0.0
    %701 = vmatprep.subr.mxu0 0.0
    %702 = vmatpush1.msra.mxu0 0.0
    %703 = vmatprep.subr.mxu0 0.0
    %704 = vmatpush1.msra.mxu0 0.0
    %705 = vmatprep.subr.mxu0 0.0
    %706 = vmatpush1.msra.mxu0 0.0
    %707 = vmatprep.subr.mxu0 0.0
    %708 = vmatpush1.msra.mxu0 0.0
    %709 = vmatprep.subr.mxu0 0.0
    %710 = vmatpush1.msra.mxu0 0.0
    %711 = vmatprep.subr.mxu0 0.0
    %712 = vmatpush1.msra.mxu0 0.0
    %713 = vmatprep.subr.mxu0 0.0
    %714 = vmatpush1.msra.mxu0 0.0
    %715 = vmatprep.subr.mxu0 0.0
    %716 = vmatpush1.msra.mxu0 0.0
    %717 = vmatprep.subr.mxu0 0.0
    %718 = vmatpush1.msra.mxu0 0.0
    %719 = vmatprep.subr.mxu0 0.0
    %720 = vmatpush1.msra.mxu0 0.0
    %721 = vmatprep.subr.mxu0 0.0
    %722 = vmatpush1.msra.mxu0 0.0
    %723 = vmatprep.mubr.f32.mxu0 0.0
    %724 = vmatmul.mubr.f32.gmra.mrb[0].mxu0 %v656
    %v725 = vpop.f32.mrb[0].mxu0
    %v726 = vadd.f32 0.0, %v725
    %v727 = vpop.f32.mrb[0].mxu0
    %728 = vdwg.mxu0
    %v729 = vadd.f32 %v658, %v726
    %v730 = vtanh.pop %v729
    %s731 = sadd.s32 %s228, 5
    %v732 = vstv %s731
    %vm733 = vcmp.lt.s32.totalorder %v732, %v211
    %v734 = vsel %vm733, 1, 0
    %735 = vset.pattern.permute.xlu0 0
    %736 = vperm.xlu0 %735, %v734
    %v737 = vpop.permute.xlu0 %736
    %vm738 = vcmp.eq.s32.totalorder %v737, 1
    %v739 = vsel %vm738, %v730, 0.0
    %s740 = scalar_lea.vmem [#allocation10], 40
    %741 = vst [vmem:[%s740] sm:$0xff] %v739
    %v742 = vsel %vm738, %v730, %v656
    %s743 = scalar_lea.vmem [#allocation3], 48
    %v744 = vld [vmem:[%s743] sm:$0xff]
    %745 = vmatprep.subr.mxu0 0.0
    %746 = vmatpush1.msra.mxu0 %v212
    %747 = vmatprep.subr.mxu0 0.0
    %748 = vmatpush1.msra.mxu0 %v213
    %749 = vmatprep.subr.mxu0 0.0
    %750 = vmatpush1.msra.mxu0 %v214
    %751 = vmatprep.subr.mxu0 0.0
    %752 = vmatpush1.msra.mxu0 %v215
    %753 = vmatprep.subr.mxu0 0.0
    %754 = vmatpush1.msra.mxu0 %v216
    %755 = vmatprep.subr.mxu0 0.0
    %756 = vmatpush1.msra.mxu0 %v217
    %757 = vmatprep.subr.mxu0 0.0
    %758 = vmatpush1.msra.mxu0 %v218
    %759 = vmatprep.subr.mxu0 0.0
    %760 = vmatpush1.msra.mxu0 %v219
    %761 = vmatprep.subr.mxu0 0.0
    %762 = vmatpush1.msra.mxu0 %v220
    %763 = vmatprep.subr.mxu0 0.0
    %764 = vmatpush1.msra.mxu0 %v221
    %765 = vmatprep.subr.mxu0 0.0
    %766 = vmatpush1.msra.mxu0 %v222
    %767 = vmatprep.subr.mxu0 0.0
    %768 = vmatpush1.msra.mxu0 %v223
    %769 = vmatprep.subr.mxu0 0.0
    %770 = vmatpush1.msra.mxu0 %v224
    %771 = vmatprep.subr.mxu0 0.0
    %772 = vmatpush1.msra.mxu0 %v225
    %773 = vmatprep.subr.mxu0 0.0
    %774 = vmatpush1.msra.mxu0 %v226
    %775 = vmatprep.subr.mxu0 0.0
    %776 = vmatpush1.msra.mxu0 %v227
    %777 = vmatprep.subr.mxu0 0.0
    %778 = vmatpush1.msra.mxu0 0.0
    %779 = vmatprep.subr.mxu0 0.0
    %780 = vmatpush1.msra.mxu0 0.0
    %781 = vmatprep.subr.mxu0 0.0
    %782 = vmatpush1.msra.mxu0 0.0
    %783 = vmatprep.subr.mxu0 0.0
    %784 = vmatpush1.msra.mxu0 0.0
    %785 = vmatprep.subr.mxu0 0.0
    %786 = vmatpush1.msra.mxu0 0.0
    %787 = vmatprep.subr.mxu0 0.0
    %788 = vmatpush1.msra.mxu0 0.0
    %789 = vmatprep.subr.mxu0 0.0
    %790 = vmatpush1.msra.mxu0 0.0
    %791 = vmatprep.subr.mxu0 0.0
    %792 = vmatpush1.msra.mxu0 0.0
    %793 = vmatprep.subr.mxu0 0.0
    %794 = vmatpush1.msra.mxu0 0.0
    %795 = vmatprep.subr.mxu0 0.0
    %796 = vmatpush1.msra.mxu0 0.0
    %797 = vmatprep.subr.mxu0 0.0
    %798 = vmatpush1.msra.mxu0 0.0
    %799 = vmatprep.subr.mxu0 0.0
    %800 = vmatpush1.msra.mxu0 0.0
    %801 = vmatprep.subr.mxu0 0.0
    %802 = vmatpush1.msra.mxu0 0.0
    %803 = vmatprep.subr.mxu0 0.0
    %804 = vmatpush1.msra.mxu0 0.0
    %805 = vmatprep.subr.mxu0 0.0
    %806 = vmatpush1.msra.mxu0 0.0
    %807 = vmatprep.subr.mxu0 0.0
    %808 = vmatpush1.msra.mxu0 0.0
    %809 = vmatprep.mubr.f32.mxu0 0.0
    %810 = vmatmul.mubr.f32.gmra.mrb[0].mxu0 %v742
    %v811 = vpop.f32.mrb[0].mxu0
    %v812 = vadd.f32 0.0, %v811
    %v813 = vpop.f32.mrb[0].mxu0
    %814 = vdwg.mxu0
    %v815 = vadd.f32 %v744, %v812
    %v816 = vtanh.pop %v815
    %s817 = sadd.s32 %s228, 6
    %v818 = vstv %s817
    %vm819 = vcmp.lt.s32.totalorder %v818, %v211
    %v820 = vsel %vm819, 1, 0
    %821 = vset.pattern.permute.xlu0 0
    %822 = vperm.xlu0 %821, %v820
    %v823 = vpop.permute.xlu0 %822
    %vm824 = vcmp.eq.s32.totalorder %v823, 1
    %v825 = vsel %vm824, %v816, 0.0
    %s826 = scalar_lea.vmem [#allocation10], 48
    %827 = vst [vmem:[%s826] sm:$0xff] %v825
    %v828 = vsel %vm824, %v816, %v742
    %s829 = scalar_lea.vmem [#allocation3], 56
    %v830 = vld [vmem:[%s829] sm:$0xff]
    %831 = vmatprep.subr.mxu0 0.0
    %832 = vmatpush1.msra.mxu0 %v212
    %833 = vmatprep.subr.mxu0 0.0
    %834 = vmatpush1.msra.mxu0 %v213
    %835 = vmatprep.subr.mxu0 0.0
    %836 = vmatpush1.msra.mxu0 %v214
    %837 = vmatprep.subr.mxu0 0.0
    %838 = vmatpush1.msra.mxu0 %v215
    %839 = vmatprep.subr.mxu0 0.0
    %840 = vmatpush1.msra.mxu0 %v216
    %841 = vmatprep.subr.mxu0 0.0
    %842 = vmatpush1.msra.mxu0 %v217
    %843 = vmatprep.subr.mxu0 0.0
    %844 = vmatpush1.msra.mxu0 %v218
    %845 = vmatprep.subr.mxu0 0.0
    %846 = vmatpush1.msra.mxu0 %v219
    %847 = vmatprep.subr.mxu0 0.0
    %848 = vmatpush1.msra.mxu0 %v220
    %849 = vmatprep.subr.mxu0 0.0
    %850 = vmatpush1.msra.mxu0 %v221
    %851 = vmatprep.subr.mxu0 0.0
    %852 = vmatpush1.msra.mxu0 %v222
    %853 = vmatprep.subr.mxu0 0.0
    %854 = vmatpush1.msra.mxu0 %v223
    %855 = vmatprep.subr.mxu0 0.0
    %856 = vmatpush1.msra.mxu0 %v224
    %857 = vmatprep.subr.mxu0 0.0
    %858 = vmatpush1.msra.mxu0 %v225
    %859 = vmatprep.subr.mxu0 0.0
    %860 = vmatpush1.msra.mxu0 %v226
    %861 = vmatprep.subr.mxu0 0.0
    %862 = vmatpush1.msra.mxu0 %v227
    %863 = vmatprep.subr.mxu0 0.0
    %864 = vmatpush1.msra.mxu0 0.0
    %865 = vmatprep.subr.mxu0 0.0
    %866 = vmatpush1.msra.mxu0 0.0
    %867 = vmatprep.subr.mxu0 0.0
    %868 = vmatpush1.msra.mxu0 0.0
    %869 = vmatprep.subr.mxu0 0.0
    %870 = vmatpush1.msra.mxu0 0.0
    %871 = vmatprep.subr.mxu0 0.0
    %872 = vmatpush1.msra.mxu0 0.0
    %873 = vmatprep.subr.mxu0 0.0
    %874 = vmatpush1.msra.mxu0 0.0
    %875 = vmatprep.subr.mxu0 0.0
    %876 = vmatpush1.msra.mxu0 0.0
    %877 = vmatprep.subr.mxu0 0.0
    %878 = vmatpush1.msra.mxu0 0.0
    %879 = vmatprep.subr.mxu0 0.0
    %880 = vmatpush1.msra.mxu0 0.0
    %881 = vmatprep.subr.mxu0 0.0
    %882 = vmatpush1.msra.mxu0 0.0
    %883 = vmatprep.subr.mxu0 0.0
    %884 = vmatpush1.msra.mxu0 0.0
    %885 = vmatprep.subr.mxu0 0.0
    %886 = vmatpush1.msra.mxu0 0.0
    %887 = vmatprep.subr.mxu0 0.0
    %888 = vmatpush1.msra.mxu0 0.0
    %889 = vmatprep.subr.mxu0 0.0
    %890 = vmatpush1.msra.mxu0 0.0
    %891 = vmatprep.subr.mxu0 0.0
    %892 = vmatpush1.msra.mxu0 0.0
    %893 = vmatprep.subr.mxu0 0.0
    %894 = vmatpush1.msra.mxu0 0.0
    %895 = vmatprep.mubr.f32.mxu0 0.0
    %896 = vmatmul.mubr.f32.gmra.mrb[0].mxu0 %v828
    %v897 = vpop.f32.mrb[0].mxu0
    %v898 = vadd.f32 0.0, %v897
    %v899 = vpop.f32.mrb[0].mxu0
    %900 = vdwg.mxu0
    %v901 = vadd.f32 %v830, %v898
    %v902 = vtanh.pop %v901
    %s903 = sadd.s32 %s228, 7
    %v904 = vstv %s903
    %vm905 = vcmp.lt.s32.totalorder %v904, %v211
    %v906 = vsel %vm905, 1, 0
    %907 = vset.pattern.permute.xlu0 0
    %908 = vperm.xlu0 %907, %v906
    %v909 = vpop.permute.xlu0 %908
    %vm910 = vcmp.eq.s32.totalorder %v909, 1
    %v911 = vsel %vm910, %v902, 0.0
    %s912 = scalar_lea.vmem [#allocation10], 56
    %913 = vst [vmem:[%s912] sm:$0xff] %v911
    %v914 = vsel %vm910, %v902, %v828
    %915 = vst [vmem:[#allocation2] sm:$0xff] %v914
    // Predicated region
    $region38: #{tpu_custom_call.1} parent=1 // pred_check
      _
    $region39: #{tpu_custom_call.1} parent=1 // pred_check_branch
      %917 = sbr.rel (0) target = $region41
    $region40: #{tpu_custom_call.1} parent=1 // pred_region
      %s919 = ssub.s32 1024, 1024
      %920 = vsyncadd [#allocation6], %s919
      %s921 = sshll.u32 [#allocation10], 4
      %s922 = int_to_ptr.vmem [resolvable:$true] %s921
      %927 = dma.vmem_to_hbm [thread:$0]  %s922, 1024, %s5, [#allocation6], 128, 128, 8
    $region41: #{tpu_custom_call.1} parent=1 // pred_fallthru
      _
    // Predicated region
    $region42: #{tpu_custom_call.1} parent=1 // pred_check
      _
    $region43: #{tpu_custom_call.1} parent=1 // pred_check_branch
      %929 = sbr.rel (0) target = $region45
    $region44: #{tpu_custom_call.1} parent=1 // pred_region
      %930 = dma.done [#allocation6], 1024
    $region45: #{tpu_custom_call.1} parent=1 // pred_fallthru
      _
    %931 = vsyncpa [#allocation5], 1
    %932 = vsyncpa [#allocation8], 1
    %933 = vsyncpa [#allocation6], 1

</llo_original>
